<compile_context>
chip_gen: v7x
topology: tpu7x:2x2x1
jax: 0.10.0
libtpu: 0.0.40
codegen_flags: <defaults>
</compile_context>

<pallas_src>
import jax
import jax.numpy as jnp
from jax.experimental import pallas as pl
from jax.experimental.pallas import tpu as pltpu

# ----------------------------- model dims -----------------------------------
N, C_IN, H, W = 2, 4, 16, 16      # input (NCHW, like PyTorch)
C_OUT = 32                        # backbone feature channels
KH = KW = 3                       # conv kernel
PAD = 1
HW = H * W                        # 256 (spatial, lives on lanes)
R_IN = N * C_IN                   # 8   rows of the flattened input (n, c_in)
R_OUT = N * C_OUT                 # 64  rows of the conv output (n, c_out)
K_BIG = KH * KW * R_IN            # 72  contraction dim: (tap, n, c_in)
K_MM = K_BIG + 1                  # 73  + ones row (folded conv bias)
PACK_COLS = K_MM + 2              # 75  + head-weight column + head-bias column


# ----------------------------- Pallas kernel --------------------------------
def iqa_fused_kernel(x_ref, wb_ref, o_ref, patches_ref):
    """Fused in-kernel im2col + conv matmul (bias folded) + ReLU + GAP + head.

    x_ref       : (R_IN, HW)          raw input; rows = (n, c_in), lanes = h*W+w
    wb_ref      : (R_OUT, PACK_COLS)  packed params (see pack_params)
    o_ref       : (1, N)              per-image score, batch on lanes
    patches_ref : (K_MM, HW) VMEM     scratch im2col tile fed to the MXU
    """
    # --- in-kernel im2col into VMEM scratch ---------------------------------
    # Zero first: lanes never written below are exactly the h-boundary taps.
    patches_ref[...] = jnp.zeros_like(patches_ref)

    # w coordinate of every lane (for the w-boundary mask of the dw=+-1 taps).
    ww = jax.lax.broadcasted_iota(jnp.int32, (R_IN, HW), 1) % W

    for kh in range(KH):
        for kw in range(KW):
            dh, dw = kh - PAD, kw - PAD
            delta = dh * W + dw                       # lane shift of this tap
            lo = max(0, -delta)                       # invalid lanes at start
            hi = max(0, delta)                        # invalid lanes at end
            width = HW - lo - hi
            src = x_ref[:, lo + delta:lo + delta + width]       # (R_IN, width)
            if dw == -1:                              # tap reads w-1
                src = jnp.where(ww[:, lo:lo + width] >= 1, src, 0.0)
            elif dw == 1:                             # tap reads w+1
                src = jnp.where(ww[:, lo:lo + width] <= W - 2, src, 0.0)
            t = kh * KW + kw
            patches_ref[t * R_IN:(t + 1) * R_IN, lo:lo + width] = src
    # Ones row: multiplies the 73rd weight column = conv bias folded into dot.
    patches_ref[K_BIG:K_MM, :] = jnp.ones((1, HW), jnp.float32)

    # --- single MXU matmul: every tap / pixel / image + bias ----------------
    feat = jnp.dot(wb_ref[:, :K_MM], patches_ref[...],
                   preferred_element_type=jnp.float32)          # (R_OUT, HW)
    feat = jnp.maximum(feat, 0.0)                               # ReLU

    # --- head: weight channel rows, GAP over lanes, per-image channel sum ---
    hw_col = wb_ref[:, K_MM:K_MM + 1]                           # (R_OUT, 1)
    hb = wb_ref[0:1, K_MM + 1:K_MM + 2]                         # (1, 1)
    rows = jnp.sum(feat * hw_col, axis=1, keepdims=True)        # (R_OUT, 1)
    inv_hw = 1.0 / float(HW)
    for n in range(N):                                          # N=2, static
        s = jnp.sum(rows[n * C_OUT:(n + 1) * C_OUT, :],
                    axis=0, keepdims=True)                      # (1, 1)
        o_ref[0:1, n:n + 1] = (s * inv_hw + hb).astype(o_ref.dtype)


# ----------------------------- parameter packing ----------------------------
def pack_params(params):
    """One-time packing of all parameters into a single (R_OUT, PACK_COLS) tensor.

    cols [0:72)  block-diagonal conv weights: W[n*C_OUT+co, t*R_IN + n'*C_IN + c]
                 = (n == n') * conv_w[kh, kw, c, co],  t = kh*KW + kw
    col  72      conv bias (folded matmul column, hit by the in-kernel ones row)
    col  73      head weight per (n, c_out) row
    col  74      head bias (broadcast)
    """
    f32 = jnp.float32
    w_taps = params["conv_w"].astype(f32).reshape(KH * KW, C_IN, C_OUT)  # (9,4,32)
    w_big = jnp.einsum("ab,tcd->adtbc", jnp.eye(N, dtype=f32), w_taps)
    w_big = w_big.reshape(R_OUT, K_BIG)                                   # (64,72)
    cb_col = jnp.tile(params["conv_b"].astype(f32), N).reshape(R_OUT, 1)
    hw_col = jnp.tile(params["head_w"].astype(f32).reshape(C_OUT), N).reshape(R_OUT, 1)
    hb_col = jnp.full((R_OUT, 1), params["head_b"].astype(f32)[0])
    return jnp.concatenate([w_big, cb_col, hw_col, hb_col], axis=1)       # (64,75)


# ----------------------------- wrapper ---------------------------------------
@jax.jit
def iqa_forward(x_nchw, wb_packed):
    # Free reshape: contiguous NCHW is already (N*C_IN, H*W) row-major.
    x2d = x_nchw.reshape(R_IN, HW)
    out = pl.pallas_call(
        iqa_fused_kernel,
        out_shape=jax.ShapeDtypeStruct((1, N), jnp.float32),
        # Gridless call: one block, one invocation (no 1-iteration grid loop).
        in_specs=[
            pl.BlockSpec((R_IN, HW), lambda *_: (0, 0)),
            pl.BlockSpec((R_OUT, PACK_COLS), lambda *_: (0, 0)),
        ],
        out_specs=pl.BlockSpec((1, N), lambda *_: (0, 0)),
        scratch_shapes=[pltpu.VMEM((K_MM, HW), jnp.float32)],
        cost_estimate=pl.CostEstimate(
            flops=2 * R_OUT * K_MM * HW,
            transcendentals=0,
            bytes_accessed=(R_IN * HW + R_OUT * PACK_COLS + N) * 4),
    )(x2d, wb_packed)
    return out.reshape(N, 1)          # module's (N, 1) output layout


# ----------------------------- reference (pure JAX) --------------------------
def iqa_reference(x_nchw, params):
    w_oihw = jnp.transpose(params["conv_w"], (3, 2, 0, 1))      # (Cout,Cin,kh,kw)
    y = jax.lax.conv_general_dilated(
        x_nchw, w_oihw, window_strides=(1, 1),
        padding=((PAD, PAD), (PAD, PAD)),
        dimension_numbers=("NCHW", "OIHW", "NCHW"))
    y = y + params["conv_b"].reshape(1, C_OUT, 1, 1)
    y = jnp.maximum(y, 0.0)
    pooled = jnp.mean(y, axis=(2, 3))                           # (N, Cout)
    return pooled @ params["head_w"] + params["head_b"]         # (N, 1)


# ----------------------------- main -------------------------------------------
if __name__ == "__main__":
    key = jax.random.PRNGKey(0)
    k_x, k_cw, k_cb, k_hw, k_hb = jax.random.split(key, 5)

    x = jax.random.normal(k_x, (N, C_IN, H, W), jnp.float32)
    params = {
        "conv_w": jax.random.normal(k_cw, (KH, KW, C_IN, C_OUT), jnp.float32) * 0.1,
        "conv_b": jax.random.normal(k_cb, (C_OUT,), jnp.float32) * 0.1,
        "head_w": jax.random.normal(k_hw, (C_OUT, 1), jnp.float32) * 0.1,
        "head_b": jax.random.normal(k_hb, (1,), jnp.float32) * 0.1,
    }

    wb = pack_params(params)          # one-time packing, not part of the forward
    out = jax.block_until_ready(iqa_forward(x, wb))
    ref = jax.block_until_ready(iqa_reference(x, params))

    assert out.shape == (N, 1)
    assert jnp.allclose(out, ref, atol=1e-4, rtol=1e-4), (out, ref)
    print("KERNEL_OK")
</pallas_src>

<mosaic_0001>
module attributes {stable_mosaic.version = 11 : i64} {
  func.func @iqa_fused_kernel(%arg0: memref<8x256xf32, #tpu.memory_space<vmem>>, %arg1: memref<64x75xf32, #tpu.memory_space<vmem>>, %arg2: memref<1x2xf32, #tpu.memory_space<vmem>>, %arg3: memref<73x256xf32, #tpu.memory_space<vmem>>) attributes {dimension_semantics = [], scalar_prefetch = 0 : i64, scratch_operands = 1 : i64, tpu.core_type = #tpu.core_type<tc>} {
    %cst = arith.constant 0.000000e+00 : f32
    %0 = vector.broadcast %cst : f32 to vector<73x256xf32>
    %c0 = arith.constant 0 : index
    %c0_0 = arith.constant 0 : index
    %1 = vector.load %arg3[%c0, %c0_0] : memref<73x256xf32, #tpu.memory_space<vmem>>, vector<73x256xf32>
    tpu.vector_store %arg3[%c0, %c0_0], %0 {strides = array<i32>} : memref<73x256xf32, #tpu.memory_space<vmem>>, vector<73x256xf32>,
    %2 = tpu.iota {dimensions = array<i32: 1>} : vector<8x256xi32>
    %c16_i32 = arith.constant 16 : i32
    %c0_i32 = arith.constant 0 : i32
    %3 = arith.cmpi eq, %c16_i32, %c0_i32 : i32
    %c1_i32 = arith.constant 1 : i32
    %4 = arith.select %3, %c1_i32, %c16_i32 : i32
    %5 = vector.broadcast %4 : i32 to vector<8x256xi32>
    %6 = arith.remsi %2, %5 : vector<8x256xi32>
    %c0_i32_1 = arith.constant 0 : i32
    %7 = vector.broadcast %c0_i32_1 : i32 to vector<8x256xi32>
    %8 = arith.cmpi ne, %6, %7 : vector<8x256xi32>
    %c0_i32_2 = arith.constant 0 : i32
    %9 = vector.broadcast %c0_i32_2 : i32 to vector<8x256xi32>
    %10 = arith.cmpi slt, %6, %9 : vector<8x256xi32>
    %c0_i32_3 = arith.constant 0 : i32
    %11 = arith.cmpi slt, %4, %c0_i32_3 : i32
    %12 = vector.broadcast %11 : i1 to vector<8x256xi1>
    %13 = vector.broadcast %12 : vector<8x256xi1> to vector<8x256xi1>
    %14 = arith.xori %10, %13 : vector<8x256xi1>
    %15 = arith.andi %14, %8 : vector<8x256xi1>
    %16 = vector.broadcast %4 : i32 to vector<8x256xi32>
    %17 = arith.addi %6, %16 : vector<8x256xi32>
    %18 = arith.select %15, %17, %6 : vector<8x256xi1>, vector<8x256xi32>
    %c0_4 = arith.constant 0 : index
    %c0_5 = arith.constant 0 : index
    %19 = vector.load %arg0[%c0_4, %c0_5] : memref<8x256xf32, #tpu.memory_space<vmem>>, vector<8x239xf32>
    %20 = vector.extract_strided_slice %18 {offsets = [0, 17], sizes = [8, 239], strides = [1, 1]} : vector<8x256xi32> to vector<8x239xi32>
    %c1_i32_6 = arith.constant 1 : i32
    %21 = vector.broadcast %c1_i32_6 : i32 to vector<8x239xi32>
    %22 = arith.cmpi sge, %20, %21 : vector<8x239xi32>
    %cst_7 = arith.constant 0.000000e+00 : f32
    %23 = vector.broadcast %cst_7 : f32 to vector<8x239xf32>
    %24 = arith.select %22, %19, %23 : vector<8x239xi1>, vector<8x239xf32>
    %c0_8 = arith.constant 0 : index
    %c17 = arith.constant 17 : index
    %25 = vector.load %arg3[%c0_8, %c17] : memref<73x256xf32, #tpu.memory_space<vmem>>, vector<8x239xf32>
    tpu.vector_store %arg3[%c0_8, %c17], %24 {strides = array<i32>} : memref<73x256xf32, #tpu.memory_space<vmem>>, vector<8x239xf32>,
    %c0_9 = arith.constant 0 : index
    %c0_10 = arith.constant 0 : index
    %26 = vector.load %arg0[%c0_9, %c0_10] : memref<8x256xf32, #tpu.memory_space<vmem>>, vector<8x240xf32>
    %c8 = arith.constant 8 : index
    %c16 = arith.constant 16 : index
    %27 = vector.load %arg3[%c8, %c16] : memref<73x256xf32, #tpu.memory_space<vmem>>, vector<8x240xf32>
    tpu.vector_store %arg3[%c8, %c16], %26 {strides = array<i32>} : memref<73x256xf32, #tpu.memory_space<vmem>>, vector<8x240xf32>,
    %c0_11 = arith.constant 0 : index
    %c0_12 = arith.constant 0 : index
    %28 = vector.load %arg0[%c0_11, %c0_12] : memref<8x256xf32, #tpu.memory_space<vmem>>, vector<8x241xf32>
    %29 = vector.extract_strided_slice %18 {offsets = [0, 15], sizes = [8, 241], strides = [1, 1]} : vector<8x256xi32> to vector<8x241xi32>
    %c14_i32 = arith.constant 14 : i32
    %30 = vector.broadcast %c14_i32 : i32 to vector<8x241xi32>
    %31 = arith.cmpi sle, %29, %30 : vector<8x241xi32>
    %cst_13 = arith.constant 0.000000e+00 : f32
    %32 = vector.broadcast %cst_13 : f32 to vector<8x241xf32>
    %33 = arith.select %31, %28, %32 : vector<8x241xi1>, vector<8x241xf32>
    %c16_14 = arith.constant 16 : index
    %c15 = arith.constant 15 : index
    %34 = vector.load %arg3[%c16_14, %c15] : memref<73x256xf32, #tpu.memory_space<vmem>>, vector<8x241xf32>
    tpu.vector_store %arg3[%c16_14, %c15], %33 {strides = array<i32>} : memref<73x256xf32, #tpu.memory_space<vmem>>, vector<8x241xf32>,
    %c0_15 = arith.constant 0 : index
    %c0_16 = arith.constant 0 : index
    %35 = vector.load %arg0[%c0_15, %c0_16] : memref<8x256xf32, #tpu.memory_space<vmem>>, vector<8x255xf32>
    %36 = vector.extract_strided_slice %18 {offsets = [0, 1], sizes = [8, 255], strides = [1, 1]} : vector<8x256xi32> to vector<8x255xi32>
    %c1_i32_17 = arith.constant 1 : i32
    %37 = vector.broadcast %c1_i32_17 : i32 to vector<8x255xi32>
    %38 = arith.cmpi sge, %36, %37 : vector<8x255xi32>
    %cst_18 = arith.constant 0.000000e+00 : f32
    %39 = vector.broadcast %cst_18 : f32 to vector<8x255xf32>
    %40 = arith.select %38, %35, %39 : vector<8x255xi1>, vector<8x255xf32>
    %c24 = arith.constant 24 : index
    %c1 = arith.constant 1 : index
    %41 = vector.load %arg3[%c24, %c1] : memref<73x256xf32, #tpu.memory_space<vmem>>, vector<8x255xf32>
    tpu.vector_store %arg3[%c24, %c1], %40 {strides = array<i32>} : memref<73x256xf32, #tpu.memory_space<vmem>>, vector<8x255xf32>,
    %c0_19 = arith.constant 0 : index
    %c0_20 = arith.constant 0 : index
    %42 = vector.load %arg0[%c0_19, %c0_20] : memref<8x256xf32, #tpu.memory_space<vmem>>, vector<8x256xf32>
    %c32 = arith.constant 32 : index
    %c0_21 = arith.constant 0 : index
    %43 = vector.load %arg3[%c32, %c0_21] : memref<73x256xf32, #tpu.memory_space<vmem>>, vector<8x256xf32>
    tpu.vector_store %arg3[%c32, %c0_21], %42 {strides = array<i32>} : memref<73x256xf32, #tpu.memory_space<vmem>>, vector<8x256xf32>,
    %c0_22 = arith.constant 0 : index
    %c1_23 = arith.constant 1 : index
    %44 = vector.load %arg0[%c0_22, %c1_23] : memref<8x256xf32, #tpu.memory_space<vmem>>, vector<8x255xf32>
    %45 = vector.extract_strided_slice %18 {offsets = [0, 0], sizes = [8, 255], strides = [1, 1]} : vector<8x256xi32> to vector<8x255xi32>
    %c14_i32_24 = arith.constant 14 : i32
    %46 = vector.broadcast %c14_i32_24 : i32 to vector<8x255xi32>
    %47 = arith.cmpi sle, %45, %46 : vector<8x255xi32>
    %cst_25 = arith.constant 0.000000e+00 : f32
    %48 = vector.broadcast %cst_25 : f32 to vector<8x255xf32>
    %49 = arith.select %47, %44, %48 : vector<8x255xi1>, vector<8x255xf32>
    %c40 = arith.constant 40 : index
    %c0_26 = arith.constant 0 : index
    %50 = vector.load %arg3[%c40, %c0_26] : memref<73x256xf32, #tpu.memory_space<vmem>>, vector<8x255xf32>
    tpu.vector_store %arg3[%c40, %c0_26], %49 {strides = array<i32>} : memref<73x256xf32, #tpu.memory_space<vmem>>, vector<8x255xf32>,
    %c0_27 = arith.constant 0 : index
    %c15_28 = arith.constant 15 : index
    %51 = vector.load %arg0[%c0_27, %c15_28] : memref<8x256xf32, #tpu.memory_space<vmem>>, vector<8x241xf32>
    %52 = vector.extract_strided_slice %18 {offsets = [0, 0], sizes = [8, 241], strides = [1, 1]} : vector<8x256xi32> to vector<8x241xi32>
    %c1_i32_29 = arith.constant 1 : i32
    %53 = vector.broadcast %c1_i32_29 : i32 to vector<8x241xi32>
    %54 = arith.cmpi sge, %52, %53 : vector<8x241xi32>
    %cst_30 = arith.constant 0.000000e+00 : f32
    %55 = vector.broadcast %cst_30 : f32 to vector<8x241xf32>
    %56 = arith.select %54, %51, %55 : vector<8x241xi1>, vector<8x241xf32>
    %c48 = arith.constant 48 : index
    %c0_31 = arith.constant 0 : index
    %57 = vector.load %arg3[%c48, %c0_31] : memref<73x256xf32, #tpu.memory_space<vmem>>, vector<8x241xf32>
    tpu.vector_store %arg3[%c48, %c0_31], %56 {strides = array<i32>} : memref<73x256xf32, #tpu.memory_space<vmem>>, vector<8x241xf32>,
    %c0_32 = arith.constant 0 : index
    %c16_33 = arith.constant 16 : index
    %58 = vector.load %arg0[%c0_32, %c16_33] : memref<8x256xf32, #tpu.memory_space<vmem>>, vector<8x240xf32>
    %c56 = arith.constant 56 : index
    %c0_34 = arith.constant 0 : index
    %59 = vector.load %arg3[%c56, %c0_34] : memref<73x256xf32, #tpu.memory_space<vmem>>, vector<8x240xf32>
    tpu.vector_store %arg3[%c56, %c0_34], %58 {strides = array<i32>} : memref<73x256xf32, #tpu.memory_space<vmem>>, vector<8x240xf32>,
    %c0_35 = arith.constant 0 : index
    %c17_36 = arith.constant 17 : index
    %60 = vector.load %arg0[%c0_35, %c17_36] : memref<8x256xf32, #tpu.memory_space<vmem>>, vector<8x239xf32>
    %61 = vector.extract_strided_slice %18 {offsets = [0, 0], sizes = [8, 239], strides = [1, 1]} : vector<8x256xi32> to vector<8x239xi32>
    %c14_i32_37 = arith.constant 14 : i32
    %62 = vector.broadcast %c14_i32_37 : i32 to vector<8x239xi32>
    %63 = arith.cmpi sle, %61, %62 : vector<8x239xi32>
    %cst_38 = arith.constant 0.000000e+00 : f32
    %64 = vector.broadcast %cst_38 : f32 to vector<8x239xf32>
    %65 = arith.select %63, %60, %64 : vector<8x239xi1>, vector<8x239xf32>
    %c64 = arith.constant 64 : index
    %c0_39 = arith.constant 0 : index
    %66 = vector.load %arg3[%c64, %c0_39] : memref<73x256xf32, #tpu.memory_space<vmem>>, vector<8x239xf32>
    tpu.vector_store %arg3[%c64, %c0_39], %65 {strides = array<i32>} : memref<73x256xf32, #tpu.memory_space<vmem>>, vector<8x239xf32>,
    %cst_40 = arith.constant 1.000000e+00 : f32
    %67 = vector.broadcast %cst_40 : f32 to vector<1x256xf32>
    %c72 = arith.constant 72 : index
    %c0_41 = arith.constant 0 : index
    %68 = vector.load %arg3[%c72, %c0_41] : memref<73x256xf32, #tpu.memory_space<vmem>>, vector<1x256xf32>
    tpu.vector_store %arg3[%c72, %c0_41], %67 {strides = array<i32>} : memref<73x256xf32, #tpu.memory_space<vmem>>, vector<1x256xf32>,
    %c0_42 = arith.constant 0 : index
    %c0_43 = arith.constant 0 : index
    %69 = vector.load %arg1[%c0_42, %c0_43] : memref<64x75xf32, #tpu.memory_space<vmem>>, vector<64x73xf32>
    %c0_44 = arith.constant 0 : index
    %c0_45 = arith.constant 0 : index
    %70 = vector.load %arg3[%c0_44, %c0_45] : memref<73x256xf32, #tpu.memory_space<vmem>>, vector<73x256xf32>
    %cst_46 = arith.constant dense<0.000000e+00> : vector<64x256xf32>
    %71 = tpu.matmul %69, %70, %cst_46 {dimension_numbers = #tpu.dot_dimension_numbers<[1], [0], [0], [1], [0, 0, 1, 1], [], []>} : vector<64x73xf32>, vector<73x256xf32>, vector<64x256xf32> -> vector<64x256xf32>
    %cst_47 = arith.constant 0.000000e+00 : f32
    %72 = vector.broadcast %cst_47 : f32 to vector<64x256xf32>
    %73 = arith.maximumf %71, %72 : vector<64x256xf32>
    %c0_48 = arith.constant 0 : index
    %c73 = arith.constant 73 : index
    %74 = vector.load %arg1[%c0_48, %c73] : memref<64x75xf32, #tpu.memory_space<vmem>>, vector<64x1xf32>
    %c0_49 = arith.constant 0 : index
    %c74 = arith.constant 74 : index
    %75 = vector.load %arg1[%c0_49, %c74] : memref<64x75xf32, #tpu.memory_space<vmem>>, vector<1x1xf32>
    %76 = vector.broadcast %74 : vector<64x1xf32> to vector<64x256xf32>
    %77 = arith.mulf %73, %76 : vector<64x256xf32>
    %cst_50 = arith.constant dense<0.000000e+00> : vector<64xf32>
    %78 = vector.multi_reduction <add>, %77, %cst_50 [1] : vector<64x256xf32> to vector<64xf32>
    %79 = vector.shape_cast %78 : vector<64xf32> to vector<64x1xf32>
    %80 = vector.extract_strided_slice %79 {offsets = [0, 0], sizes = [32, 1], strides = [1, 1]} : vector<64x1xf32> to vector<32x1xf32>
    %cst_51 = arith.constant dense<0.000000e+00> : vector<1xf32>
    %81 = vector.multi_reduction <add>, %80, %cst_51 [0] : vector<32x1xf32> to vector<1xf32>
    %82 = vector.shape_cast %81 : vector<1xf32> to vector<1x1xf32>
    %cst_52 = arith.constant 3.906250e-03 : f32
    %83 = vector.broadcast %cst_52 : f32 to vector<1x1xf32>
    %84 = arith.mulf %82, %83 : vector<1x1xf32>
    %85 = arith.addf %84, %75 : vector<1x1xf32>
    %c0_53 = arith.constant 0 : index
    %c0_54 = arith.constant 0 : index
    %86 = vector.load %arg2[%c0_53, %c0_54] : memref<1x2xf32, #tpu.memory_space<vmem>>, vector<1x1xf32>
    tpu.vector_store %arg2[%c0_53, %c0_54], %85 {strides = array<i32>} : memref<1x2xf32, #tpu.memory_space<vmem>>, vector<1x1xf32>,
    %87 = vector.extract_strided_slice %79 {offsets = [32, 0], sizes = [32, 1], strides = [1, 1]} : vector<64x1xf32> to vector<32x1xf32>
    %cst_55 = arith.constant dense<0.000000e+00> : vector<1xf32>
    %88 = vector.multi_reduction <add>, %87, %cst_55 [0] : vector<32x1xf32> to vector<1xf32>
    %89 = vector.shape_cast %88 : vector<1xf32> to vector<1x1xf32>
    %cst_56 = arith.constant 3.906250e-03 : f32
    %90 = vector.broadcast %cst_56 : f32 to vector<1x1xf32>
    %91 = arith.mulf %89, %90 : vector<1x1xf32>
    %92 = arith.addf %91, %75 : vector<1x1xf32>
    %c0_57 = arith.constant 0 : index
    %c1_58 = arith.constant 1 : index
    %93 = vector.load %arg2[%c0_57, %c1_58] : memref<1x2xf32, #tpu.memory_space<vmem>>, vector<1x1xf32>
    tpu.vector_store %arg2[%c0_57, %c1_58], %92 {strides = array<i32>} : memref<1x2xf32, #tpu.memory_space<vmem>>, vector<1x1xf32>,
    return
  }
}

</mosaic_0001>

<llo_original>
// kernel: iqa_forward.1
$region0: #{iqa_forward.1}
  #allocation0 [shape = 'u32[]', space=smem, size = 0x4, offset = 0x4, fixed_abs, tag = 'smem constant byte address 0x4 - core index']
  #allocation1 [shape = 'u32[144,128]{1,0:T(1,128)}', space=vmem, size = 0x12000, scoped, tag = 'internal scratch']
  #allocation2 [shape = 'f32[73,256]{1,0:T(8,128)}', space=vmem, size = 0x14000, scoped, tag = 'scratch operand']
  %s0 = inlined_call_operand.vmem [shape: f32[8,256], index: 0, kind: input, shape index: {}]
  %s1 = inlined_call_operand.vmem [shape: f32[64,75], index: 1, kind: input, shape index: {}]
  %s2 = inlined_call_operand.hbm [shape: f32[1,2], index: 2, kind: output, shape index: {}]
  %s3 = sld [smem:[#allocation0]]
  $region18: #{iqa_forward.1} parent=0
    _
  %s5 = ssub.s32 1, %s3
  %s6 = scalar_select 0, %s5, %s3
  $region1: #{iqa_forward.1} parent=0
    #allocation3 [shape = 'u8[512]{0}', space=vmem, size = 0x400, scoped, tag = 'output window, operand 0, single buffered']
    #allocation4 [shape = 's32[1]{0}', space=sflag, size = 0x4, scoped, tag = 'scoped memory for iqa_forward.1']
    %7 = vsyncpa [#allocation4], 0
    // Predicated region
    $region2: #{iqa_forward.1} parent=1 // pred_check
      _
    $region3: #{iqa_forward.1} parent=1 // pred_check_branch
      %9 = sbr.rel (0) target = $region5
    $region4: #{iqa_forward.1} parent=1 // pred_region
      _
    $region5: #{iqa_forward.1} parent=1 // pred_fallthru
      _
    // Predicated region
    $region6: #{iqa_forward.1} parent=1 // pred_check
      _
    $region7: #{iqa_forward.1} parent=1 // pred_check_branch
      %11 = sbr.rel (0) target = $region9
    $region8: #{iqa_forward.1} parent=1 // pred_region
      _
    $region9: #{iqa_forward.1} parent=1 // pred_fallthru
      _
    %12 = vst [vmem:[#allocation2] sm:$0xff] 0.0
    %13 = vst [vmem:[#allocation2 + $0x8] sm:$0xff] 0.0
    %14 = vst [vmem:[#allocation2 + $0x10] sm:$0xff] 0.0
    %15 = vst [vmem:[#allocation2 + $0x18] sm:$0xff] 0.0
    %16 = vst [vmem:[#allocation2 + $0x20] sm:$0xff] 0.0
    %17 = vst [vmem:[#allocation2 + $0x28] sm:$0xff] 0.0
    %18 = vst [vmem:[#allocation2 + $0x30] sm:$0xff] 0.0
    %19 = vst [vmem:[#allocation2 + $0x38] sm:$0xff] 0.0
    %20 = vst [vmem:[#allocation2 + $0x40] sm:$0xff] 0.0
    %21 = vst [vmem:[#allocation2 + $0x48] sm:$0xff] 0.0
    %22 = vst [vmem:[#allocation2 + $0x50] sm:$0xff] 0.0
    %23 = vst [vmem:[#allocation2 + $0x58] sm:$0xff] 0.0
    %24 = vst [vmem:[#allocation2 + $0x60] sm:$0xff] 0.0
    %25 = vst [vmem:[#allocation2 + $0x68] sm:$0xff] 0.0
    %26 = vst [vmem:[#allocation2 + $0x70] sm:$0xff] 0.0
    %27 = vst [vmem:[#allocation2 + $0x78] sm:$0xff] 0.0
    %28 = vst [vmem:[#allocation2 + $0x80] sm:$0xff] 0.0
    %29 = vst [vmem:[#allocation2 + $0x88] sm:$0xff] 0.0
    %30 = vst [vmem:[#allocation2 + $0x90] sm:$0x1] 0.0
    %31 = vst [vmem:[#allocation2 + $0x98] sm:$0x1] 0.0
    %v32 = vlaneseq
    %v33 = vand.u32 %v32, 127
    %v34 = vadd.s32 %v33, 128
    %vm35 = vcmp.lt.s32.totalorder %v33, 0
    %v36 = vsub.s32 0, %v33
    %v37 = vsel %vm35, %v36, %v33
    %v38 = vshrl.u32 %v37, 4
    %v39 = vand.u32 %v37, 15
    %v40 = vsub.s32 0, %v39
    %v41 = vsel %vm35, %v40, %v39
    %vm42 = vcmp.lt.s32.totalorder %v34, 0
    %v43 = vsub.s32 0, %v34
    %v44 = vsel %vm42, %v43, %v34
    %v45 = vshrl.u32 %v44, 4
    %v46 = vand.u32 %v44, 15
    %v47 = vsub.s32 0, %v46
    %v48 = vsel %vm42, %v47, %v46
    %vm49 = vcmp.ne.s32.totalorder %v41, 0
    %vm50 = vcmp.ne.s32.totalorder %v48, 0
    %vm51 = vcmp.lt.s32.totalorder %v41, 0
    %vm52 = vcmp.lt.s32.totalorder %v48, 0
    %vm53 = vmand %vm51, %vm49
    %vm54 = vmand %vm52, %vm50
    %v55 = vadd.s32 %v41, 16
    %v56 = vadd.s32 %v48, 16
    %v57 = vsel %vm53, %v55, %v41
    %v58 = vsel %vm54, %v56, %v48
    %v59 = vld [vmem:[%s0] sm:$0xff]
    %v60 = vld [vmem:[%s0 + $0x8] sm:$0xff]
    %vm61 = vcmp.ge.s32.totalorder %v57, 1
    %vm62 = vcmp.ge.s32.totalorder %v58, 1
    %65 = vrot.lane.b32.xlu0 %v59, 17
    %v66 = vpop.permute.xlu0 %65
    %67 = vrot.lane.b32.xlu0 %v60, 17
    %v68 = vpop.permute.xlu0 %67
    %vm69 = vcmask 138240
    %v70 = vsel %vm69, %v66, %v68
    %v73 = vsel %vm61, %v66, 0.0
    %v74 = vsel %vm62, %v70, 0.0
    %vm75 = vcmask 1047688
    %76 = vst.msk [vmem:[#allocation2] sm:$0xff] %vm75, %v73
    %77 = vst [vmem:[#allocation2 + $0x8] sm:$0xff] %v74
    %v78 = vld [vmem:[%s0] sm:$0xff]
    %v79 = vld [vmem:[%s0 + $0x8] sm:$0xff]
    %82 = vrot.lane.b32.xlu0 %v78, 16
    %v83 = vpop.permute.xlu0 %82
    %84 = vrot.lane.b32.xlu0 %v79, 16
    %v85 = vpop.permute.xlu0 %84
    %vm86 = vcmask 130048
    %v87 = vsel %vm86, %v83, %v85
    %vm90 = vcmask 1047680
    %91 = vst.msk [vmem:[#allocation2 + $0x10] sm:$0xff] %vm90, %v83
    %92 = vst [vmem:[#allocation2 + $0x18] sm:$0xff] %v87
    %v93 = vld [vmem:[%s0] sm:$0xff]
    %v94 = vld [vmem:[%s0 + $0x8] sm:$0xff]
    %vm95 = vcmp.le.s32.totalorder %v57, 14
    %vm96 = vcmp.le.s32.totalorder %v58, 14
    %99 = vrot.lane.b32.xlu0 %v93, 15
    %v100 = vpop.permute.xlu0 %99
    %101 = vrot.lane.b32.xlu0 %v94, 15
    %v102 = vpop.permute.xlu0 %101
    %vm103 = vcmask 121856
    %v104 = vsel %vm103, %v100, %v102
    %v107 = vsel %vm95, %v100, 0.0
    %v108 = vsel %vm96, %v104, 0.0
    %vm109 = vcmask 1047672
    %110 = vst.msk [vmem:[#allocation2 + $0x20] sm:$0xff] %vm109, %v107
    %111 = vst [vmem:[#allocation2 + $0x28] sm:$0xff] %v108
    %v112 = vld [vmem:[%s0] sm:$0xff]
    %v113 = vld [vmem:[%s0 + $0x8] sm:$0xff]
    %116 = vrot.lane.b32.xlu0 %v112, 1
    %v117 = vpop.permute.xlu0 %116
    %118 = vrot.lane.b32.xlu0 %v113, 1
    %v119 = vpop.permute.xlu0 %118
    %vm120 = vcmask 7168
    %v121 = vsel %vm120, %v117, %v119
    %v124 = vsel %vm61, %v117, 0.0
    %v125 = vsel %vm62, %v121, 0.0
    %vm126 = vcmask 1047560
    %127 = vst.msk [vmem:[#allocation2 + $0x30] sm:$0xff] %vm126, %v124
    %128 = vst [vmem:[#allocation2 + $0x38] sm:$0xff] %v125
    %v129 = vld [vmem:[%s0] sm:$0xff]
    %v130 = vld [vmem:[%s0 + $0x8] sm:$0xff]
    %131 = vst [vmem:[#allocation2 + $0x40] sm:$0xff] %v129
    %132 = vst [vmem:[#allocation2 + $0x48] sm:$0xff] %v130
    %v133 = vld [vmem:[%s0] sm:$0xff]
    %v134 = vld [vmem:[%s0 + $0x8] sm:$0xff]
    %137 = vrot.lane.b32.xlu0 %v133, 127
    %v138 = vpop.permute.xlu0 %137
    %139 = vrot.lane.b32.xlu0 %v134, 127
    %v140 = vpop.permute.xlu0 %139
    %vm141 = vcmask 1039360
    %v142 = vsel %vm141, %v138, %v140
    %v145 = vsel %vm95, %v142, 0.0
    %v146 = vsel %vm96, %v140, 0.0
    %147 = vst [vmem:[#allocation2 + $0x50] sm:$0xff] %v145
    %148 = vst.msk [vmem:[#allocation2 + $0x58] sm:$0xff] %vm141, %v146
    %v149 = vld [vmem:[%s0] sm:$0xff]
    %v150 = vld [vmem:[%s0 + $0x8] sm:$0xff]
    %153 = vrot.lane.b32.xlu0 %v149, 113
    %v154 = vpop.permute.xlu0 %153
    %155 = vrot.lane.b32.xlu0 %v150, 113
    %v156 = vpop.permute.xlu0 %155
    %vm157 = vcmask 924672
    %v158 = vsel %vm157, %v154, %v156
    %v161 = vsel %vm61, %v158, 0.0
    %v162 = vsel %vm62, %v156, 0.0
    %163 = vst [vmem:[#allocation2 + $0x60] sm:$0xff] %v161
    %164 = vst.msk [vmem:[#allocation2 + $0x68] sm:$0xff] %vm157, %v162
    %v165 = vld [vmem:[%s0] sm:$0xff]
    %v166 = vld [vmem:[%s0 + $0x8] sm:$0xff]
    %169 = vrot.lane.b32.xlu0 %v165, 112
    %v170 = vpop.permute.xlu0 %169
    %171 = vrot.lane.b32.xlu0 %v166, 112
    %v172 = vpop.permute.xlu0 %171
    %vm173 = vcmask 916480
    %v174 = vsel %vm173, %v170, %v172
    %177 = vst [vmem:[#allocation2 + $0x70] sm:$0xff] %v174
    %178 = vst.msk [vmem:[#allocation2 + $0x78] sm:$0xff] %vm173, %v172
    %v179 = vld [vmem:[%s0] sm:$0xff]
    %v180 = vld [vmem:[%s0 + $0x8] sm:$0xff]
    %183 = vrot.lane.b32.xlu0 %v179, 111
    %v184 = vpop.permute.xlu0 %183
    %185 = vrot.lane.b32.xlu0 %v180, 111
    %v186 = vpop.permute.xlu0 %185
    %vm187 = vcmask 908288
    %v188 = vsel %vm187, %v184, %v186
    %v191 = vsel %vm95, %v188, 0.0
    %v192 = vsel %vm96, %v186, 0.0
    %193 = vst [vmem:[#allocation2 + $0x80] sm:$0xff] %v191
    %194 = vst.msk [vmem:[#allocation2 + $0x88] sm:$0xff] %vm187, %v192
    %v195 = vlaneseq
    %vm196 = vcmp.ge.s32.totalorder %v195, 0
    %vm197 = vcmp.lt.s32.totalorder %v195, 256
    %vm198 = vmand %vm196, %vm197
    %s199 = scalar_lea.vmem [#allocation2], 144
    %200 = vst.msk [vmem:[%s199] ss:$8 sm:$0x3] %vm198, 1.0
    %201 = vst.msk [vmem:[%s199] ss:$8 sm:$0x0] %vm198, 1.0
    %v202 = vld [vmem:[%s1] sm:$0xff]
    %v203 = vld [vmem:[%s1 + $0x8] sm:$0xff]
    %v204 = vld [vmem:[%s1 + $0x10] sm:$0xff]
    %v205 = vld [vmem:[%s1 + $0x18] sm:$0xff]
    %v206 = vld [vmem:[%s1 + $0x20] sm:$0xff]
    %v207 = vld [vmem:[%s1 + $0x28] sm:$0xff]
    %v208 = vld [vmem:[%s1 + $0x30] sm:$0xff]
    %v209 = vld [vmem:[%s1 + $0x38] sm:$0xff]
    %v210 = vld [vmem:[#allocation2] sm:$0xff]
    %v211 = vld [vmem:[#allocation2 + $0x8] sm:$0xff]
    %v212 = vld [vmem:[#allocation2 + $0x10] sm:$0xff]
    %v213 = vld [vmem:[#allocation2 + $0x18] sm:$0xff]
    %v214 = vld [vmem:[#allocation2 + $0x20] sm:$0xff]
    %v215 = vld [vmem:[#allocation2 + $0x28] sm:$0xff]
    %v216 = vld [vmem:[#allocation2 + $0x30] sm:$0xff]
    %v217 = vld [vmem:[#allocation2 + $0x38] sm:$0xff]
    %v218 = vld [vmem:[#allocation2 + $0x40] sm:$0xff]
    %v219 = vld [vmem:[#allocation2 + $0x48] sm:$0xff]
    %v220 = vld [vmem:[#allocation2 + $0x50] sm:$0xff]
    %v221 = vld [vmem:[#allocation2 + $0x58] sm:$0xff]
    %v222 = vld [vmem:[#allocation2 + $0x60] sm:$0xff]
    %v223 = vld [vmem:[#allocation2 + $0x68] sm:$0xff]
    %v224 = vld [vmem:[#allocation2 + $0x70] sm:$0xff]
    %v225 = vld [vmem:[#allocation2 + $0x78] sm:$0xff]
    %v226 = vld [vmem:[#allocation2 + $0x80] sm:$0xff]
    %v227 = vld [vmem:[#allocation2 + $0x88] sm:$0xff]
    %v228 = vld [vmem:[#allocation2 + $0x90] sm:$0x1]
    %v229 = vld [vmem:[#allocation2 + $0x98] sm:$0x1]
    %vm230 = vcmask 596992
    %v232 = vsel %vm230, %v202, 0
    %v235 = vsel %vm230, %v203, 0
    %v238 = vsel %vm230, %v204, 0
    %v241 = vsel %vm230, %v205, 0
    %v244 = vsel %vm230, %v206, 0
    %v247 = vsel %vm230, %v207, 0
    %v250 = vsel %vm230, %v208, 0
    %v253 = vsel %vm230, %v209, 0
    %vm255 = vcmask 1040384
    %v257 = vsel %vm255, %v228, 0
    %v260 = vsel %vm255, %v229, 0
    %262 = vmatprep.subr.mxu0 %v211
    %263 = vmatpush1.msra.mxu0 %v210
    %264 = vmatprep.subr.mxu0 %v213
    %265 = vmatpush1.msra.mxu0 %v212
    %266 = vmatprep.subr.mxu0 %v215
    %267 = vmatpush1.msra.mxu0 %v214
    %268 = vmatprep.subr.mxu0 %v217
    %269 = vmatpush1.msra.mxu0 %v216
    %270 = vmatprep.subr.mxu0 %v219
    %271 = vmatpush1.msra.mxu0 %v218
    %272 = vmatprep.subr.mxu0 %v221
    %273 = vmatpush1.msra.mxu0 %v220
    %274 = vmatprep.subr.mxu0 %v223
    %275 = vmatpush1.msra.mxu0 %v222
    %276 = vmatprep.subr.mxu0 %v225
    %277 = vmatpush1.msra.mxu0 %v224
    %278 = vmatprep.subr.mxu0 %v227
    %279 = vmatpush1.msra.mxu0 %v226
    %280 = vmatprep.subr.mxu0 %v260
    %281 = vmatpush1.msra.mxu0 %v257
    %282 = vmatprep.subr.mxu0 0.0
    %283 = vmatpush1.msra.mxu0 0.0
    %284 = vmatprep.subr.mxu0 0.0
    %285 = vmatpush1.msra.mxu0 0.0
    %286 = vmatprep.subr.mxu0 0.0
    %287 = vmatpush1.msra.mxu0 0.0
    %288 = vmatprep.subr.mxu0 0.0
    %289 = vmatpush1.msra.mxu0 0.0
    %290 = vmatprep.subr.mxu0 0.0
    %291 = vmatpush1.msra.mxu0 0.0
    %292 = vmatprep.subr.mxu0 0.0
    %293 = vmatpush1.msra.mxu0 0.0
    %294 = vmatprep.subr.mxu0 0.0
    %295 = vmatpush1.msra.mxu0 0.0
    %296 = vmatprep.subr.mxu0 0.0
    %297 = vmatpush1.msra.mxu0 0.0
    %298 = vmatprep.subr.mxu0 0.0
    %299 = vmatpush1.msra.mxu0 0.0
    %300 = vmatprep.subr.mxu0 0.0
    %301 = vmatpush1.msra.mxu0 0.0
    %302 = vmatprep.subr.mxu0 0.0
    %303 = vmatpush1.msra.mxu0 0.0
    %304 = vmatprep.subr.mxu0 0.0
    %305 = vmatpush1.msra.mxu0 0.0
    %306 = vmatprep.subr.mxu0 0.0
    %307 = vmatpush1.msra.mxu0 0.0
    %308 = vmatprep.subr.mxu0 0.0
    %309 = vmatpush1.msra.mxu0 0.0
    %310 = vmatprep.subr.mxu0 0.0
    %311 = vmatpush1.msra.mxu0 0.0
    %312 = vmatprep.subr.mxu0 0.0
    %313 = vmatpush1.msra.mxu0 0.0
    %314 = vmatprep.subr.mxu0 0.0
    %315 = vmatpush1.msra.mxu0 0.0
    %316 = vmatprep.subr.mxu0 0.0
    %317 = vmatpush1.msra.mxu0 0.0
    %318 = vmatprep.subr.mxu0 0.0
    %319 = vmatpush1.msra.mxu0 0.0
    %320 = vmatprep.subr.mxu0 0.0
    %321 = vmatpush1.msra.mxu0 0.0
    %322 = vmatprep.subr.mxu0 0.0
    %323 = vmatpush1.msra.mxu0 0.0
    %324 = vmatprep.subr.mxu0 0.0
    %325 = vmatpush1.msra.mxu0 0.0
    %326 = vmatprep.mubr.f32.mxu0 0.0
    %327 = vmatmul.mubr.f32.gmra.mrb[0].mxu0 %v232
    %v328 = vpop.f32.mrb[0].mxu0
    %v329 = vadd.f32 0.0, %v328
    %v330 = vpop.f32.mrb[0].mxu0
    %v331 = vadd.f32 0.0, %v330
    %332 = vmatprep.mubr.f32.mxu0 0.0
    %333 = vmatmul.mubr.f32.gmra.mrb[0].mxu0 %v235
    %v334 = vpop.f32.mrb[0].mxu0
    %v335 = vadd.f32 0.0, %v334
    %v336 = vpop.f32.mrb[0].mxu0
    %v337 = vadd.f32 0.0, %v336
    %338 = vmatprep.mubr.f32.mxu0 0.0
    %339 = vmatmul.mubr.f32.gmra.mrb[0].mxu0 %v238
    %v340 = vpop.f32.mrb[0].mxu0
    %v341 = vadd.f32 0.0, %v340
    %v342 = vpop.f32.mrb[0].mxu0
    %v343 = vadd.f32 0.0, %v342
    %344 = vmatprep.mubr.f32.mxu0 0.0
    %345 = vmatmul.mubr.f32.gmra.mrb[0].mxu0 %v241
    %v346 = vpop.f32.mrb[0].mxu0
    %v347 = vadd.f32 0.0, %v346
    %v348 = vpop.f32.mrb[0].mxu0
    %v349 = vadd.f32 0.0, %v348
    %350 = vmatprep.mubr.f32.mxu0 0.0
    %351 = vmatmul.mubr.f32.gmra.mrb[0].mxu0 %v244
    %v352 = vpop.f32.mrb[0].mxu0
    %v353 = vadd.f32 0.0, %v352
    %v354 = vpop.f32.mrb[0].mxu0
    %v355 = vadd.f32 0.0, %v354
    %356 = vmatprep.mubr.f32.mxu0 0.0
    %357 = vmatmul.mubr.f32.gmra.mrb[0].mxu0 %v247
    %v358 = vpop.f32.mrb[0].mxu0
    %v359 = vadd.f32 0.0, %v358
    %v360 = vpop.f32.mrb[0].mxu0
    %v361 = vadd.f32 0.0, %v360
    %362 = vmatprep.mubr.f32.mxu0 0.0
    %363 = vmatmul.mubr.f32.gmra.mrb[0].mxu0 %v250
    %v364 = vpop.f32.mrb[0].mxu0
    %v365 = vadd.f32 0.0, %v364
    %v366 = vpop.f32.mrb[0].mxu0
    %v367 = vadd.f32 0.0, %v366
    %368 = vmatprep.mubr.f32.mxu0 0.0
    %369 = vmatmul.mubr.f32.gmra.mrb[0].mxu0 %v253
    %v370 = vpop.f32.mrb[0].mxu0
    %v371 = vadd.f32 0.0, %v370
    %v372 = vpop.f32.mrb[0].mxu0
    %v373 = vadd.f32 0.0, %v372
    %374 = vdwg.mxu0
    %v375 = vmax.f32 %v329, 0.0
    %v376 = vmax.f32 %v331, 0.0
    %v377 = vmax.f32 %v335, 0.0
    %v378 = vmax.f32 %v337, 0.0
    %v379 = vmax.f32 %v341, 0.0
    %v380 = vmax.f32 %v343, 0.0
    %v381 = vmax.f32 %v347, 0.0
    %v382 = vmax.f32 %v349, 0.0
    %v383 = vmax.f32 %v353, 0.0
    %v384 = vmax.f32 %v355, 0.0
    %v385 = vmax.f32 %v359, 0.0
    %v386 = vmax.f32 %v361, 0.0
    %v387 = vmax.f32 %v365, 0.0
    %v388 = vmax.f32 %v367, 0.0
    %v389 = vmax.f32 %v371, 0.0
    %v390 = vmax.f32 %v373, 0.0
    %v391 = vld [vmem:[%s1] sm:$0x1]
    %392 = vset.pattern.permute.xlu0 73
    %393 = vperm.xlu0 %392, %v202
    %v394 = vpop.permute.xlu0 %393
    %396 = vset.pattern.permute.xlu0 73
    %397 = vperm.xlu0 %396, %v203
    %v398 = vpop.permute.xlu0 %397
    %400 = vset.pattern.permute.xlu0 73
    %401 = vperm.xlu0 %400, %v204
    %v402 = vpop.permute.xlu0 %401
    %404 = vset.pattern.permute.xlu0 73
    %405 = vperm.xlu0 %404, %v205
    %v406 = vpop.permute.xlu0 %405
    %408 = vset.pattern.permute.xlu0 73
    %409 = vperm.xlu0 %408, %v206
    %v410 = vpop.permute.xlu0 %409
    %412 = vset.pattern.permute.xlu0 73
    %413 = vperm.xlu0 %412, %v207
    %v414 = vpop.permute.xlu0 %413
    %416 = vset.pattern.permute.xlu0 73
    %417 = vperm.xlu0 %416, %v208
    %v418 = vpop.permute.xlu0 %417
    %420 = vset.pattern.permute.xlu0 73
    %421 = vperm.xlu0 %420, %v209
    %v422 = vpop.permute.xlu0 %421
    %v424 = vmul.f32 %v375, %v394
    %v425 = vmul.f32 %v376, %v394
    %v426 = vmul.f32 %v377, %v398
    %v427 = vmul.f32 %v378, %v398
    %v428 = vmul.f32 %v379, %v402
    %v429 = vmul.f32 %v380, %v402
    %v430 = vmul.f32 %v381, %v406
    %v431 = vmul.f32 %v382, %v406
    %v432 = vmul.f32 %v383, %v410
    %v433 = vmul.f32 %v384, %v410
    %v434 = vmul.f32 %v385, %v414
    %v435 = vmul.f32 %v386, %v414
    %v436 = vmul.f32 %v387, %v418
    %v437 = vmul.f32 %v388, %v418
    %v438 = vmul.f32 %v389, %v422
    %v439 = vmul.f32 %v390, %v422
    %v440 = vadd.f32 %v424, %v425
    %441 = vadd.xlane.f32.xlu0 %v440
    %v442 = vpop.xlane.xlu0 %441
    %v443 = vadd.f32 %v426, %v427
    %444 = vadd.xlane.f32.xlu0 %v443
    %v445 = vpop.xlane.xlu0 %444
    %v446 = vadd.f32 %v428, %v429
    %447 = vadd.xlane.f32.xlu0 %v446
    %v448 = vpop.xlane.xlu0 %447
    %v449 = vadd.f32 %v430, %v431
    %450 = vadd.xlane.f32.xlu0 %v449
    %v451 = vpop.xlane.xlu0 %450
    %v452 = vadd.f32 %v432, %v433
    %453 = vadd.xlane.f32.xlu0 %v452
    %v454 = vpop.xlane.xlu0 %453
    %v455 = vadd.f32 %v434, %v435
    %456 = vadd.xlane.f32.xlu0 %v455
    %v457 = vpop.xlane.xlu0 %456
    %v458 = vadd.f32 %v436, %v437
    %459 = vadd.xlane.f32.xlu0 %v458
    %v460 = vpop.xlane.xlu0 %459
    %v461 = vadd.f32 %v438, %v439
    %462 = vadd.xlane.f32.xlu0 %v461
    %v463 = vpop.xlane.xlu0 %462
    %v464 = vadd.f32 %v442, %v445
    %v465 = vadd.f32 %v464, %v448
    %v466 = vadd.f32 %v465, %v451
    %v467 = vrot.slane %v466, 4
    %v468 = vadd.f32 %v466, %v467
    %v469 = vrot.slane %v468, 2
    %v470 = vadd.f32 %v468, %v469
    %v471 = vrot.slane %v470, 1
    %v472 = vadd.f32 %v470, %v471
    %v473 = vmul.f32 %v472, 0.00390625
    %v474 = vadd.f32 %v473, %v391
    %476 = vrot.lane.b32.xlu0 %v474, 54
    %v477 = vpop.permute.xlu0 %476
    %vm479 = vcmask 0
    %480 = vst.msk [vmem:[#allocation3] sm:$0x1] %vm479, %v477
    %v481 = vadd.f32 %v454, %v457
    %v482 = vadd.f32 %v481, %v460
    %v483 = vadd.f32 %v482, %v463
    %v484 = vrot.slane %v483, 4
    %v485 = vadd.f32 %v483, %v484
    %v486 = vrot.slane %v485, 2
    %v487 = vadd.f32 %v485, %v486
    %v488 = vrot.slane %v487, 1
    %v489 = vadd.f32 %v487, %v488
    %v490 = vmul.f32 %v489, 0.00390625
    %v491 = vadd.f32 %v490, %v391
    %493 = vrot.lane.b32.xlu0 %v491, 55
    %v494 = vpop.permute.xlu0 %493
    %vm496 = vcmask 8200
    %497 = vst.msk [vmem:[#allocation3] sm:$0x1] %vm496, %v494
    // Predicated region
    $region10: #{iqa_forward.1} parent=1 // pred_check
      _
    $region11: #{iqa_forward.1} parent=1 // pred_check_branch
      %499 = sbr.rel (0) target = $region13
    $region12: #{iqa_forward.1} parent=1 // pred_region
      %s501 = ssub.s32 16, 16
      %502 = vsyncadd [#allocation4], %s501
      %s504 = sshll.u32 [#allocation3], 4
      %s505 = int_to_ptr.vmem [resolvable:$true] %s504
      %507 = dma.vmem_to_hbm [thread:$0]  %s505, 16, %s2, [#allocation4]
    $region13: #{iqa_forward.1} parent=1 // pred_fallthru
      _
    // Predicated region
    $region14: #{iqa_forward.1} parent=1 // pred_check
      _
    $region15: #{iqa_forward.1} parent=1 // pred_check_branch
      %509 = sbr.rel (0) target = $region17
    $region16: #{iqa_forward.1} parent=1 // pred_region
      %510 = dma.done [#allocation4], 16
    $region17: #{iqa_forward.1} parent=1 // pred_fallthru
      _
    %511 = vsyncpa [#allocation4], 1

</llo_original>
